<compile_context>
chip_gen: v5e
topology: v5e:2x2
jax: 0.10.0
libtpu: 0.0.40
codegen_flags: <defaults>
</compile_context>

<pallas_src>
import jax
import jax.numpy as jnp
from jax.experimental import pallas as pl
from jax.experimental.pallas import tpu as pltpu


def _round_up(a, b):
    return ((a + b - 1) // b) * b


def _ffn_kernel(x_ref, w1_ref, b1_ref, w2_ref, b2_ref, o_ref, acc_ref):
    # grid = (row_tiles, hidden_tiles); axis 1 is the hidden-dim reduction.
    k = pl.program_id(1)

    @pl.when(k == 0)
    def _init():
        acc_ref[...] = jnp.zeros_like(acc_ref)

    # GEMM 1 (MXU, f32 accumulation) + bias + ReLU for this hidden slice.
    h = jnp.dot(x_ref[...], w1_ref[...], preferred_element_type=jnp.float32)
    h = jnp.maximum(h + b1_ref[...].astype(jnp.float32), 0.0)  # VPU, f32 epilogue

    # GEMM 2: accumulate this hidden slice's contribution into the f32 scratch.
    # (cast of h to the weight dtype is exact for f32 weights; for bf16 weights
    #  it is the usual documented bf16 MXU path.)
    acc_ref[...] += jnp.dot(h.astype(w2_ref.dtype), w2_ref[...],
                            preferred_element_type=jnp.float32)

    @pl.when(k == pl.num_programs(1) - 1)
    def _finalize():
        o_ref[...] = (acc_ref[...] + b2_ref[...].astype(jnp.float32)).astype(o_ref.dtype)


def _default_vmem_limit_bytes():
    # Raise the scoped-VMEM limit above the conservative defaults (16 MiB v5e /
    # 32 MiB v6e, v7x) while keeping ~25% headroom below physical capacity
    # (128 MiB v5e/v6e, 64 MiB v7x).
    try:
        cap = pltpu.get_tpu_info().vmem_capacity_bytes
    except Exception:
        cap = 64 * 1024 * 1024
    return int(min(100 * 1024 * 1024, (cap * 3) // 4))


def feed_forward(x, w1, b1, w2, b2, *, tile_rows=512, hidden_tile=512,
                 vmem_limit_bytes=None):
    """y = relu(x @ w1 + b1) @ w2 + b2, applied over the last dim of x."""
    orig_shape = x.shape
    d_in = orig_shape[-1]
    d_hid = w1.shape[1]
    d_out = w2.shape[1]

    x2d = x.reshape(-1, d_in)
    rows = x2d.shape[0]
    sublane = 16 if x2d.dtype == jnp.bfloat16 else 8

    # ---- Row tiling: large tiles, but aim for >=2 row tiles (v7x megacore).
    # No activation pad/slice: Pallas masks the ragged last row block.
    if rows <= sublane:
        tm = rows                                   # block == full array dim
    else:
        target = max(min(tile_rows, pl.cdiv(rows, 2)), sublane)
        tm = _round_up(target, sublane)
    n_row = pl.cdiv(rows, tm)

    # ---- Hidden-dim tiling (reduction axis). Zero-padding the hidden dim is
    # exact: padded columns give relu(0 + 0) = 0, which contributes 0 to y.
    if d_hid <= hidden_tile:
        tk, d_hid_p = d_hid, d_hid
    else:
        tk = max(128, (hidden_tile // 128) * 128)
        d_hid_p = _round_up(d_hid, tk)
    n_k = d_hid_p // tk

    # ---- Lane-dense output: pad d_out up to a multiple of 128 (zero columns
    # of w2/b2), so stores are unmasked full-lane vst.
    d_out_p = _round_up(d_out, 128)

    if d_hid_p != d_hid:
        w1 = jnp.pad(w1, ((0, 0), (0, d_hid_p - d_hid)))
        b1 = jnp.pad(b1, ((0, d_hid_p - d_hid),))
        w2 = jnp.pad(w2, ((0, d_hid_p - d_hid), (0, 0)))
    if d_out_p != d_out:
        w2 = jnp.pad(w2, ((0, 0), (0, d_out_p - d_out)))
        b2 = jnp.pad(b2, ((0, d_out_p - d_out),))

    b1_2d = b1.reshape(1, d_hid_p)
    b2_2d = b2.reshape(1, d_out_p)

    if vmem_limit_bytes is None:
        vmem_limit_bytes = _default_vmem_limit_bytes()

    flops = 2 * rows * (d_in * d_hid_p + d_hid_p * d_out_p)
    bytes_accessed = int(
        x2d.size * x2d.dtype.itemsize
        + w1.size * w1.dtype.itemsize + b1_2d.size * b1_2d.dtype.itemsize
        + w2.size * w2.dtype.itemsize + b2_2d.size * b2_2d.dtype.itemsize
        + rows * d_out_p * x2d.dtype.itemsize)

    def _build(single_buffer_consts):
        def _spec(shape, index_map, constant):
            # Constant-index-map operands (resident weights/biases) only need
            # one VMEM buffer; streamed operands keep default double-buffering.
            if constant and single_buffer_consts:
                return pl.BlockSpec(shape, index_map,
                                    pipeline_mode=pl.Buffered(1))
            return pl.BlockSpec(shape, index_map)

        return pl.pallas_call(
            _ffn_kernel,
            out_shape=jax.ShapeDtypeStruct((rows, d_out_p), x.dtype),
            grid_spec=pltpu.PrefetchScalarGridSpec(
                num_scalar_prefetch=0,
                grid=(n_row, n_k),
                in_specs=[
                    pl.BlockSpec((tm, d_in), lambda i, k: (i, 0)),
                    _spec((d_in, tk), lambda i, k: (0, k), n_k == 1),
                    _spec((1, tk), lambda i, k: (0, k), n_k == 1),
                    _spec((tk, d_out_p), lambda i, k: (k, 0), n_k == 1),
                    _spec((1, d_out_p), lambda i, k: (0, 0), True),
                ],
                out_specs=pl.BlockSpec((tm, d_out_p), lambda i, k: (i, 0)),
                scratch_shapes=[pltpu.VMEM((tm, d_out_p), jnp.float32)],
            ),
            compiler_params=pltpu.CompilerParams(
                dimension_semantics=("parallel", "arbitrary"),
                vmem_limit_bytes=int(vmem_limit_bytes)),
            cost_estimate=pl.CostEstimate(
                flops=flops, transcendentals=0, bytes_accessed=bytes_accessed),
        )

    try:
        out = _build(True)(x2d, w1, b1_2d, w2, b2_2d)
    except Exception:
        # Fallback if this JAX build rejects single-buffered (Buffered(1)) specs.
        out = _build(False)(x2d, w1, b1_2d, w2, b2_2d)

    if d_out_p != d_out:
        out = out[:, :d_out]
    return out.reshape(*orig_shape[:-1], d_out)


def init_params(key, input_dim, hidden_dim, output_dim, dtype=jnp.float32):
    """Deterministic init mirroring nn.Linear's uniform(-1/sqrt(fan_in), ...)."""
    k1, k2, k3, k4 = jax.random.split(key, 4)
    lim1 = 1.0 / jnp.sqrt(input_dim)
    lim2 = 1.0 / jnp.sqrt(hidden_dim)
    w1 = jax.random.uniform(k1, (input_dim, hidden_dim), dtype, -lim1, lim1)
    b1 = jax.random.uniform(k2, (hidden_dim,), dtype, -lim1, lim1)
    w2 = jax.random.uniform(k3, (hidden_dim, output_dim), dtype, -lim2, lim2)
    b2 = jax.random.uniform(k4, (output_dim,), dtype, -lim2, lim2)
    return w1, b1, w2, b2


if __name__ == "__main__":
    batch, seq = 2, 8
    input_dim, hidden_dim, output_dim = 32, 64, 32

    key = jax.random.PRNGKey(0)
    k_x, k_p = jax.random.split(key)
    x = jax.random.normal(k_x, (batch, seq, input_dim), jnp.float32)
    w1, b1, w2, b2 = init_params(k_p, input_dim, hidden_dim, output_dim)

    y = feed_forward(x, w1, b1, w2, b2)
    y = jax.block_until_ready(y)

    # Pure-JAX reference check.
    ref = jnp.maximum(x @ w1 + b1, 0.0) @ w2 + b2
    assert y.shape == (batch, seq, output_dim)
    assert jnp.allclose(y, ref, atol=1e-5, rtol=1e-5), "mismatch vs reference"

    print("KERNEL_OK")
</pallas_src>

<mosaic_0001>
module attributes {stable_mosaic.version = 11 : i64} {
  func.func @_ffn_kernel(%arg0: i32, %arg1: i32, %arg2: memref<8x32xf32, #tpu.memory_space<vmem>>, %arg3: memref<32x64xf32, #tpu.memory_space<vmem>>, %arg4: memref<1x64xf32, #tpu.memory_space<vmem>>, %arg5: memref<64x128xf32, #tpu.memory_space<vmem>>, %arg6: memref<1x128xf32, #tpu.memory_space<vmem>>, %arg7: memref<8x128xf32, #tpu.memory_space<vmem>>, %arg8: memref<8x128xf32, #tpu.memory_space<vmem>>) attributes {dimension_semantics = [#tpu.dimension_semantics<parallel>, #tpu.dimension_semantics<arbitrary>], iteration_bounds = array<i64: 2, 1>, scalar_prefetch = 0 : i64, scratch_operands = 1 : i64, tpu.core_type = #tpu.core_type<tc>, window_params = [{transform_indices = @transform_0, window_bounds = array<i64: 8, 32>}, {pipeline_mode = #tpu.pipeline_mode<synchronous>, transform_indices = @transform_1, window_bounds = array<i64: 32, 64>}, {pipeline_mode = #tpu.pipeline_mode<synchronous>, transform_indices = @transform_2, window_bounds = array<i64: 1, 64>}, {pipeline_mode = #tpu.pipeline_mode<synchronous>, transform_indices = @transform_3, window_bounds = array<i64: 64, 128>}, {pipeline_mode = #tpu.pipeline_mode<synchronous>, transform_indices = @transform_4, window_bounds = array<i64: 1, 128>}, {transform_indices = @transform_5, window_bounds = array<i64: 8, 128>}]} {
    %c0_i32 = arith.constant 0 : i32
    %0 = arith.cmpi eq, %arg1, %c0_i32 : i32
    %1 = arith.extui %0 : i1 to i32
    %c0_i32_0 = arith.constant 0 : i32
    %2 = arith.cmpi ne, %1, %c0_i32_0 : i32
    scf.if %2 {
      %cst_16 = arith.constant 0.000000e+00 : f32
      %19 = vector.broadcast %cst_16 : f32 to vector<8x128xf32>
      %c0_17 = arith.constant 0 : index
      %c0_18 = arith.constant 0 : index
      %20 = vector.load %arg8[%c0_17, %c0_18] : memref<8x128xf32, #tpu.memory_space<vmem>>, vector<8x128xf32>
      tpu.vector_store %arg8[%c0_17, %c0_18], %19 {strides = array<i32>} : memref<8x128xf32, #tpu.memory_space<vmem>>, vector<8x128xf32>,
    } else {
    }
    %c0 = arith.constant 0 : index
    %c0_1 = arith.constant 0 : index
    %3 = vector.load %arg2[%c0, %c0_1] : memref<8x32xf32, #tpu.memory_space<vmem>>, vector<8x32xf32>
    %c0_2 = arith.constant 0 : index
    %c0_3 = arith.constant 0 : index
    %4 = vector.load %arg3[%c0_2, %c0_3] : memref<32x64xf32, #tpu.memory_space<vmem>>, vector<32x64xf32>
    %cst = arith.constant dense<0.000000e+00> : vector<8x64xf32>
    %5 = tpu.matmul %3, %4, %cst {dimension_numbers = #tpu.dot_dimension_numbers<[1], [0], [0], [1], [0, 0, 1, 1], [], []>} : vector<8x32xf32>, vector<32x64xf32>, vector<8x64xf32> -> vector<8x64xf32>
    %c0_4 = arith.constant 0 : index
    %c0_5 = arith.constant 0 : index
    %6 = vector.load %arg4[%c0_4, %c0_5] : memref<1x64xf32, #tpu.memory_space<vmem>>, vector<1x64xf32>
    %7 = vector.broadcast %6 : vector<1x64xf32> to vector<8x64xf32>
    %8 = arith.addf %5, %7 : vector<8x64xf32>
    %cst_6 = arith.constant 0.000000e+00 : f32
    %9 = vector.broadcast %cst_6 : f32 to vector<8x64xf32>
    %10 = arith.maximumf %8, %9 : vector<8x64xf32>
    %c0_7 = arith.constant 0 : index
    %c0_8 = arith.constant 0 : index
    %11 = vector.load %arg8[%c0_7, %c0_8] : memref<8x128xf32, #tpu.memory_space<vmem>>, vector<8x128xf32>
    %c0_9 = arith.constant 0 : index
    %c0_10 = arith.constant 0 : index
    %12 = vector.load %arg5[%c0_9, %c0_10] : memref<64x128xf32, #tpu.memory_space<vmem>>, vector<64x128xf32>
    %cst_11 = arith.constant dense<0.000000e+00> : vector<8x128xf32>
    %13 = tpu.matmul %10, %12, %cst_11 {dimension_numbers = #tpu.dot_dimension_numbers<[1], [0], [0], [1], [0, 0, 1, 1], [], []>} : vector<8x64xf32>, vector<64x128xf32>, vector<8x128xf32> -> vector<8x128xf32>
    %14 = arith.addf %11, %13 : vector<8x128xf32>
    %c0_12 = arith.constant 0 : index
    %c0_13 = arith.constant 0 : index
    %15 = vector.load %arg8[%c0_12, %c0_13] : memref<8x128xf32, #tpu.memory_space<vmem>>, vector<8x128xf32>
    tpu.vector_store %arg8[%c0_12, %c0_13], %14 {strides = array<i32>} : memref<8x128xf32, #tpu.memory_space<vmem>>, vector<8x128xf32>,
    %c0_i32_14 = arith.constant 0 : i32
    %16 = arith.cmpi eq, %arg1, %c0_i32_14 : i32
    %17 = arith.extui %16 : i1 to i32
    %c0_i32_15 = arith.constant 0 : i32
    %18 = arith.cmpi ne, %17, %c0_i32_15 : i32
    scf.if %18 {
      %c0_16 = arith.constant 0 : index
      %c0_17 = arith.constant 0 : index
      %19 = vector.load %arg8[%c0_16, %c0_17] : memref<8x128xf32, #tpu.memory_space<vmem>>, vector<8x128xf32>
      %c0_18 = arith.constant 0 : index
      %c0_19 = arith.constant 0 : index
      %20 = vector.load %arg6[%c0_18, %c0_19] : memref<1x128xf32, #tpu.memory_space<vmem>>, vector<1x128xf32>
      %21 = vector.broadcast %20 : vector<1x128xf32> to vector<8x128xf32>
      %22 = arith.addf %19, %21 : vector<8x128xf32>
      %c0_20 = arith.constant 0 : index
      %c0_21 = arith.constant 0 : index
      %23 = vector.load %arg7[%c0_20, %c0_21] : memref<8x128xf32, #tpu.memory_space<vmem>>, vector<8x128xf32>
      tpu.vector_store %arg7[%c0_20, %c0_21], %22 {strides = array<i32>} : memref<8x128xf32, #tpu.memory_space<vmem>>, vector<8x128xf32>,
    } else {
    }
    return
  }
  func.func @transform_0(%arg0: i32, %arg1: i32) -> (i32, i32) {
    %c0_i32 = arith.constant 0 : i32
    %c0_i32_0 = arith.constant 0 : i32
    return %arg0, %c0_i32 : i32, i32
  }
  func.func @transform_1(%arg0: i32, %arg1: i32) -> (i32, i32) {
    %c0_i32 = arith.constant 0 : i32
    %c0_i32_0 = arith.constant 0 : i32
    return %c0_i32, %arg1 : i32, i32
  }
  func.func @transform_2(%arg0: i32, %arg1: i32) -> (i32, i32) {
    %c0_i32 = arith.constant 0 : i32
    %c0_i32_0 = arith.constant 0 : i32
    return %c0_i32, %arg1 : i32, i32
  }
  func.func @transform_3(%arg0: i32, %arg1: i32) -> (i32, i32) {
    %c0_i32 = arith.constant 0 : i32
    %c0_i32_0 = arith.constant 0 : i32
    return %arg1, %c0_i32 : i32, i32
  }
  func.func @transform_4(%arg0: i32, %arg1: i32) -> (i32, i32) {
    %c0_i32 = arith.constant 0 : i32
    %c0_i32_0 = arith.constant 0 : i32
    %c0_i32_1 = arith.constant 0 : i32
    return %c0_i32, %c0_i32_0 : i32, i32
  }
  func.func @transform_5(%arg0: i32, %arg1: i32) -> (i32, i32) {
    %c0_i32 = arith.constant 0 : i32
    %c0_i32_0 = arith.constant 0 : i32
    return %arg0, %c0_i32 : i32, i32
  }
}

module attributes {stable_mosaic.version = 11 : i64} {
  func.func @_ffn_kernel(%arg0: i32, %arg1: i32, %arg2: memref<8x32xf32, #tpu.memory_space<vmem>>, %arg3: memref<32x64xf32, #tpu.memory_space<vmem>>, %arg4: memref<1x64xf32, #tpu.memory_space<vmem>>, %arg5: memref<64x128xf32, #tpu.memory_space<vmem>>, %arg6: memref<1x128xf32, #tpu.memory_space<vmem>>, %arg7: memref<8x128xf32, #tpu.memory_space<vmem>>, %arg8: memref<8x128xf32, #tpu.memory_space<vmem>>) attributes {dimension_semantics = [#tpu.dimension_semantics<parallel>, #tpu.dimension_semantics<arbitrary>], iteration_bounds = array<i64: 2, 1>, scalar_prefetch = 0 : i64, scratch_operands = 1 : i64, tpu.core_type = #tpu.core_type<tc>, window_params = [{transform_indices = @transform_0, window_bounds = array<i64: 8, 32>}, {transform_indices = @transform_1, window_bounds = array<i64: 32, 64>}, {transform_indices = @transform_2, window_bounds = array<i64: 1, 64>}, {transform_indices = @transform_3, window_bounds = array<i64: 64, 128>}, {pipeline_mode = #tpu.pipeline_mode<synchronous>, transform_indices = @transform_4, window_bounds = array<i64: 1, 128>}, {transform_indices = @transform_5, window_bounds = array<i64: 8, 128>}]} {
    %c0_i32 = arith.constant 0 : i32
    %0 = arith.cmpi eq, %arg1, %c0_i32 : i32
    %1 = arith.extui %0 : i1 to i32
    %c0_i32_0 = arith.constant 0 : i32
    %2 = arith.cmpi ne, %1, %c0_i32_0 : i32
    scf.if %2 {
      %cst_16 = arith.constant 0.000000e+00 : f32
      %19 = vector.broadcast %cst_16 : f32 to vector<8x128xf32>
      %c0_17 = arith.constant 0 : index
      %c0_18 = arith.constant 0 : index
      %20 = vector.load %arg8[%c0_17, %c0_18] : memref<8x128xf32, #tpu.memory_space<vmem>>, vector<8x128xf32>
      tpu.vector_store %arg8[%c0_17, %c0_18], %19 {strides = array<i32>} : memref<8x128xf32, #tpu.memory_space<vmem>>, vector<8x128xf32>,
    } else {
    }
    %c0 = arith.constant 0 : index
    %c0_1 = arith.constant 0 : index
    %3 = vector.load %arg2[%c0, %c0_1] : memref<8x32xf32, #tpu.memory_space<vmem>>, vector<8x32xf32>
    %c0_2 = arith.constant 0 : index
    %c0_3 = arith.constant 0 : index
    %4 = vector.load %arg3[%c0_2, %c0_3] : memref<32x64xf32, #tpu.memory_space<vmem>>, vector<32x64xf32>
    %cst = arith.constant dense<0.000000e+00> : vector<8x64xf32>
    %5 = tpu.matmul %3, %4, %cst {dimension_numbers = #tpu.dot_dimension_numbers<[1], [0], [0], [1], [0, 0, 1, 1], [], []>} : vector<8x32xf32>, vector<32x64xf32>, vector<8x64xf32> -> vector<8x64xf32>
    %c0_4 = arith.constant 0 : index
    %c0_5 = arith.constant 0 : index
    %6 = vector.load %arg4[%c0_4, %c0_5] : memref<1x64xf32, #tpu.memory_space<vmem>>, vector<1x64xf32>
    %7 = vector.broadcast %6 : vector<1x64xf32> to vector<8x64xf32>
    %8 = arith.addf %5, %7 : vector<8x64xf32>
    %cst_6 = arith.constant 0.000000e+00 : f32
    %9 = vector.broadcast %cst_6 : f32 to vector<8x64xf32>
    %10 = arith.maximumf %8, %9 : vector<8x64xf32>
    %c0_7 = arith.constant 0 : index
    %c0_8 = arith.constant 0 : index
    %11 = vector.load %arg8[%c0_7, %c0_8] : memref<8x128xf32, #tpu.memory_space<vmem>>, vector<8x128xf32>
    %c0_9 = arith.constant 0 : index
    %c0_10 = arith.constant 0 : index
    %12 = vector.load %arg5[%c0_9, %c0_10] : memref<64x128xf32, #tpu.memory_space<vmem>>, vector<64x128xf32>
    %cst_11 = arith.constant dense<0.000000e+00> : vector<8x128xf32>
    %13 = tpu.matmul %10, %12, %cst_11 {dimension_numbers = #tpu.dot_dimension_numbers<[1], [0], [0], [1], [0, 0, 1, 1], [], []>} : vector<8x64xf32>, vector<64x128xf32>, vector<8x128xf32> -> vector<8x128xf32>
    %14 = arith.addf %11, %13 : vector<8x128xf32>
    %c0_12 = arith.constant 0 : index
    %c0_13 = arith.constant 0 : index
    %15 = vector.load %arg8[%c0_12, %c0_13] : memref<8x128xf32, #tpu.memory_space<vmem>>, vector<8x128xf32>
    tpu.vector_store %arg8[%c0_12, %c0_13], %14 {strides = array<i32>} : memref<8x128xf32, #tpu.memory_space<vmem>>, vector<8x128xf32>,
    %c0_i32_14 = arith.constant 0 : i32
    %16 = arith.cmpi eq, %arg1, %c0_i32_14 : i32
    %17 = arith.extui %16 : i1 to i32
    %c0_i32_15 = arith.constant 0 : i32
    %18 = arith.cmpi ne, %17, %c0_i32_15 : i32
    scf.if %18 {
      %c0_16 = arith.constant 0 : index
      %c0_17 = arith.constant 0 : index
      %19 = vector.load %arg8[%c0_16, %c0_17] : memref<8x128xf32, #tpu.memory_space<vmem>>, vector<8x128xf32>
      %c0_18 = arith.constant 0 : index
      %c0_19 = arith.constant 0 : index
      %20 = vector.load %arg6[%c0_18, %c0_19] : memref<1x128xf32, #tpu.memory_space<vmem>>, vector<1x128xf32>
      %21 = vector.broadcast %20 : vector<1x128xf32> to vector<8x128xf32>
      %22 = arith.addf %19, %21 : vector<8x128xf32>
      %c0_20 = arith.constant 0 : index
      %c0_21 = arith.constant 0 : index
      %23 = vector.load %arg7[%c0_20, %c0_21] : memref<8x128xf32, #tpu.memory_space<vmem>>, vector<8x128xf32>
      tpu.vector_store %arg7[%c0_20, %c0_21], %22 {strides = array<i32>} : memref<8x128xf32, #tpu.memory_space<vmem>>, vector<8x128xf32>,
    } else {
    }
    return
  }
  func.func @transform_0(%arg0: i32, %arg1: i32) -> (i32, i32) {
    %c0_i32 = arith.constant 0 : i32
    %c0_i32_0 = arith.constant 0 : i32
    return %arg0, %c0_i32 : i32, i32
  }
  func.func @transform_1(%arg0: i32, %arg1: i32) -> (i32, i32) {
    %c0_i32 = arith.constant 0 : i32
    %c0_i32_0 = arith.constant 0 : i32
    return %c0_i32, %arg1 : i32, i32
  }
  func.func @transform_2(%arg0: i32, %arg1: i32) -> (i32, i32) {
    %c0_i32 = arith.constant 0 : i32
    %c0_i32_0 = arith.constant 0 : i32
    return %c0_i32, %arg1 : i32, i32
  }
  func.func @transform_3(%arg0: i32, %arg1: i32) -> (i32, i32) {
    %c0_i32 = arith.constant 0 : i32
    %c0_i32_0 = arith.constant 0 : i32
    return %arg1, %c0_i32 : i32, i32
  }
  func.func @transform_4(%arg0: i32, %arg1: i32) -> (i32, i32) {
    %c0_i32 = arith.constant 0 : i32
    %c0_i32_0 = arith.constant 0 : i32
    %c0_i32_1 = arith.constant 0 : i32
    return %c0_i32, %c0_i32_0 : i32, i32
  }
  func.func @transform_5(%arg0: i32, %arg1: i32) -> (i32, i32) {
    %c0_i32 = arith.constant 0 : i32
    %c0_i32_0 = arith.constant 0 : i32
    return %arg0, %c0_i32 : i32, i32
  }
}

</mosaic_0001>

<llo_original>
// kernel: tpu_custom_call.1
$region0: #{tpu_custom_call.1}
  #allocation0 [shape = 'u32[]', space=smem, size = 0x4, offset = 0x4, fixed_abs, tag = 'smem constant byte address 0x4 - core index']
  #allocation1 [shape = 'u32[72,128]{1,0:T(1,128)}', space=vmem, size = 0x9000, scoped, tag = 'internal scratch']
  #allocation2 [shape = 'f32[8,128]{1,0:T(8,128)}', space=vmem, size = 0x1000, scoped, tag = 'scratch operand']
  %s0 = inlined_call_operand.hbm [shape: f32[16,32], index: 0, kind: input, shape index: {}]
  %s1 = inlined_call_operand.hbm [shape: f32[32,64], index: 1, kind: input, shape index: {}]
  %s2 = inlined_call_operand.vmem [shape: f32[1,64], index: 2, kind: input, shape index: {}]
  %s3 = inlined_call_operand.hbm [shape: f32[64,128], index: 3, kind: input, shape index: {}]
  %s4 = inlined_call_operand.vmem [shape: f32[1,128], index: 4, kind: input, shape index: {}]
  %s5 = inlined_call_operand.hbm [shape: f32[16,128], index: 5, kind: output, shape index: {}]
  %s6 = sld [smem:[#allocation0]]
  $region73: #{tpu_custom_call.1} parent=0
    _
  %s8 = ssub.s32 1, %s6
  %s9 = scalar_select 0, %s8, %s6
  $region1: #{tpu_custom_call.1} parent=0
    #allocation3 [shape = 'u8[8192]{0}', space=vmem, size = 0x2000, scoped, tag = 'input window, operand 0']
    #allocation4 [shape = 's32[2]{0}', space=sflag, size = 0x8, scoped, tag = 'scoped memory for tpu_custom_call.1']
    #allocation5 [shape = 's32[2]{0}', space=sflag, size = 0x8, scoped, tag = 'scoped memory for tpu_custom_call.1']
    #allocation6 [shape = 'u8[16384]{0}', space=vmem, size = 0x4000, scoped, tag = 'input window, operand 1, single buffered']
    #allocation7 [shape = 's32[1]{0}', space=sflag, size = 0x4, scoped, tag = 'scoped memory for tpu_custom_call.1']
    #allocation8 [shape = 'u8[32768]{0}', space=vmem, size = 0x8000, scoped, tag = 'input window, operand 3, single buffered']
    #allocation9 [shape = 'u8[8192]{0}', space=vmem, size = 0x2000, scoped, tag = 'output window, operand 0']
    %10 = vsyncpa [#allocation4], 0
    %s11 = scalar_lea.sflag [#allocation4], 1
    %12 = vsyncpa %s11, 0
    %13 = vsyncpa [#allocation7], 0
    %14 = vsyncpa [#allocation5], 0
    %s15 = scalar_lea.sflag [#allocation5], 1
    %16 = vsyncpa %s15, 0
    loop: start=0, step=1, limit=4
    $region2: #{tpu_custom_call.1} parent=1 // loop_pre_header
      _
    $region3: #{tpu_custom_call.1} parent=1 // loop_header
      %s18 = sphi 0, %s22
      %p19 = scmp.ge.s32.totalorder %s18, 4
      %s25 = sphi 0, %s37
      %s26 = sphi 0, %s33
      %s27 = sphi 0, %s25
      %s28 = sphi 0, %s26
      %s29 = sphi 0, %s27
      %s30 = sphi 0, %s28
      %s40 = sphi 0, %s42
      %s43 = sphi 0, %s40
      %s44 = sphi 0, %s43
      %s60 = sphi 0, %s44
      %s66 = sphi 0, %s68
      %s69 = sphi 0, %s66
      %s70 = sphi 0, %s69
      %s86 = sphi 0, %s70
      %s92 = sphi 0, %s94
      %s95 = sphi 0, %s92
      %s96 = sphi 0, %s95
      %s112 = sphi 0, %s96
      %s118 = sphi 0, %s120
      %s121 = sphi 0, %s118
      %s122 = sphi 0, %s121
      %s138 = sphi 0, %s122
      %s142 = sphi 0, %s142
      %s144 = sphi 0, %s142
      %s145 = sphi 0, %s144
      %s159 = sphi 0, %s145
      %s165 = sphi 0, %s167
      %s168 = sphi 0, %s165
      %s169 = sphi 0, %s168
      %s185 = sphi 0, %s169
    $region4: #{tpu_custom_call.1} parent=1 // loop_header_branch
      %21 = sbr.rel (%p19) target = $region8
    $region5: #{tpu_custom_call.1} parent=1 // loop_body
      %s23 = ssub.s32 %s18, 1
      %s24 = ssub.s32 %s18, 2
      %s31 = sadd.s32 1, %s26
      %p32 = scmp.ge.s32.totalorder %s31, 1
      %s33 = scalar_select %p32, 0, %s31
      %s34 = sadd.s32 1, %s25
      %s35 = scalar_select %p32, %s34, %s25
      %p36 = scmp.ge.s32.totalorder %s35, 2
      %s37 = scalar_select %p36, 0, %s35
      %s38 = ssub.s32 %s25, %s37
      %p39 = scmp.eq.s32.totalorder %s38, 0
      %s41 = sadd.s32 %s40, 1
      %s42 = scalar_select %p39, %s40, %s41
      %p45 = pneg %p39
      %p46 = scmp.eq.s32.totalorder %s18, 1
      %p47 = por %p45, %p46
      %p48 = scmp.ne.s32.totalorder %s40, %s43
      %p49 = scmp.eq.s32.totalorder %s18, 0
      %p50 = por %p48, %p49
      %p51 = scmp.ne.s32.totalorder %s40, %s43
      %p52 = scmp.eq.s32.totalorder %s23, 1
      %p53 = por %p51, %p52
      %p54 = scmp.ne.s32.totalorder %s43, %s44
      %p55 = scmp.eq.s32.totalorder %s23, 0
      %p56 = por %p54, %p55
      %p57 = scmp.ne.s32.totalorder %s43, %s44
      %p58 = scmp.eq.s32.totalorder %s24, 1
      %p59 = por %p57, %p58
      %p61 = scmp.ne.s32.totalorder %s44, %s60
      %p62 = scmp.eq.s32.totalorder %s24, 0
      %p63 = por %p61, %p62
      %s64 = ssub.s32 %s26, %s33
      %p65 = scmp.eq.s32.totalorder %s64, 0
      %s67 = sadd.s32 %s66, 1
      %s68 = scalar_select %p65, %s66, %s67
      %p71 = pneg %p65
      %p72 = scmp.eq.s32.totalorder %s18, 1
      %p73 = por %p71, %p72
      %p74 = scmp.ne.s32.totalorder %s66, %s69
      %p75 = scmp.eq.s32.totalorder %s18, 0
      %p76 = por %p74, %p75
      %p77 = scmp.ne.s32.totalorder %s66, %s69
      %p78 = scmp.eq.s32.totalorder %s23, 1
      %p79 = por %p77, %p78
      %p80 = scmp.ne.s32.totalorder %s69, %s70
      %p81 = scmp.eq.s32.totalorder %s23, 0
      %p82 = por %p80, %p81
      %p83 = scmp.ne.s32.totalorder %s69, %s70
      %p84 = scmp.eq.s32.totalorder %s24, 1
      %p85 = por %p83, %p84
      %p87 = scmp.ne.s32.totalorder %s70, %s86
      %p88 = scmp.eq.s32.totalorder %s24, 0
      %p89 = por %p87, %p88
      %s90 = ssub.s32 %s26, %s33
      %p91 = scmp.eq.s32.totalorder %s90, 0
      %s93 = sadd.s32 %s92, 1
      %s94 = scalar_select %p91, %s92, %s93
      %p97 = pneg %p91
      %p98 = scmp.eq.s32.totalorder %s18, 1
      %p99 = por %p97, %p98
      %p100 = scmp.ne.s32.totalorder %s92, %s95
      %p101 = scmp.eq.s32.totalorder %s18, 0
      %p102 = por %p100, %p101
      %p103 = scmp.ne.s32.totalorder %s92, %s95
      %p104 = scmp.eq.s32.totalorder %s23, 1
      %p105 = por %p103, %p104
      %p106 = scmp.ne.s32.totalorder %s95, %s96
      %p107 = scmp.eq.s32.totalorder %s23, 0
      %p108 = por %p106, %p107
      %p109 = scmp.ne.s32.totalorder %s95, %s96
      %p110 = scmp.eq.s32.totalorder %s24, 1
      %p111 = por %p109, %p110
      %p113 = scmp.ne.s32.totalorder %s96, %s112
      %p114 = scmp.eq.s32.totalorder %s24, 0
      %p115 = por %p113, %p114
      %s116 = ssub.s32 %s26, %s33
      %p117 = scmp.eq.s32.totalorder %s116, 0
      %s119 = sadd.s32 %s118, 1
      %s120 = scalar_select %p117, %s118, %s119
      %p123 = pneg %p117
      %p124 = scmp.eq.s32.totalorder %s18, 1
      %p125 = por %p123, %p124
      %p126 = scmp.ne.s32.totalorder %s118, %s121
      %p127 = scmp.eq.s32.totalorder %s18, 0
      %p128 = por %p126, %p127
      %p129 = scmp.ne.s32.totalorder %s118, %s121
      %p130 = scmp.eq.s32.totalorder %s23, 1
      %p131 = por %p129, %p130
      %p132 = scmp.ne.s32.totalorder %s121, %s122
      %p133 = scmp.eq.s32.totalorder %s23, 0
      %p134 = por %p132, %p133
      %p135 = scmp.ne.s32.totalorder %s121, %s122
      %p136 = scmp.eq.s32.totalorder %s24, 1
      %p137 = por %p135, %p136
      %p139 = scmp.ne.s32.totalorder %s122, %s138
      %p140 = scmp.eq.s32.totalorder %s24, 0
      %p141 = por %p139, %p140
      %s143 = sadd.s32 %s142, 1
      %p146 = scmp.eq.s32.totalorder %s18, 1
      %p147 = scmp.ne.s32.totalorder %s142, %s144
      %p148 = scmp.eq.s32.totalorder %s18, 0
      %p149 = por %p147, %p148
      %p150 = scmp.ne.s32.totalorder %s142, %s144
      %p151 = scmp.eq.s32.totalorder %s23, 1
      %p152 = por %p150, %p151
      %p153 = scmp.ne.s32.totalorder %s144, %s145
      %p154 = scmp.eq.s32.totalorder %s23, 0
      %p155 = por %p153, %p154
      %p156 = scmp.ne.s32.totalorder %s144, %s145
      %p157 = scmp.eq.s32.totalorder %s24, 1
      %p158 = por %p156, %p157
      %p160 = scmp.ne.s32.totalorder %s145, %s159
      %p161 = scmp.eq.s32.totalorder %s24, 0
      %p162 = por %p160, %p161
      %s163 = ssub.s32 %s25, %s37
      %p164 = scmp.eq.s32.totalorder %s163, 0
      %s166 = sadd.s32 %s165, 1
      %s167 = scalar_select %p164, %s165, %s166
      %p170 = pneg %p164
      %p171 = scmp.eq.s32.totalorder %s18, 1
      %p172 = por %p170, %p171
      %p173 = scmp.ne.s32.totalorder %s165, %s168
      %p174 = scmp.eq.s32.totalorder %s18, 0
      %p175 = por %p173, %p174
      %p176 = scmp.ne.s32.totalorder %s165, %s168
      %p177 = scmp.eq.s32.totalorder %s23, 1
      %p178 = por %p176, %p177
      %p179 = scmp.ne.s32.totalorder %s168, %s169
      %p180 = scmp.eq.s32.totalorder %s23, 0
      %p181 = por %p179, %p180
      %p182 = scmp.ne.s32.totalorder %s168, %s169
      %p183 = scmp.eq.s32.totalorder %s24, 1
      %p184 = por %p182, %p183
      %p186 = scmp.ne.s32.totalorder %s169, %s185
      %p187 = scmp.eq.s32.totalorder %s24, 0
      %p188 = por %p186, %p187
      %p189 = scmp.le.s32.totalorder 1, %s18
      %p190 = scmp.lt.s32.totalorder %s18, 3
      %p191 = pnand %p189, %p190
      %p192 = pneg %p191
      // Predicated region
      $region9: #{tpu_custom_call.1} parent=5 // pred_check
        _
      $region10: #{tpu_custom_call.1} parent=5 // pred_check_branch
        %194 = sbr.rel (%p191) target = $region12
      $region11: #{tpu_custom_call.1} parent=5 // pred_region
        %s195 = ssub.s32 %s18, 1
        // Predicated region
        $region13: #{tpu_custom_call.1} parent=11 // pred_check
          %p196 = pneg %p82
        $region14: #{tpu_custom_call.1} parent=11 // pred_check_branch
          %198 = sbr.rel (%p196) target = $region16
        $region15: #{tpu_custom_call.1} parent=11 // pred_region
          %200 = vsyncadd [#allocation7], 0
          %s201 = smul.addr %s28, 8
          %s202 = scalar_lea.hbm %s1, %s201
          %s203 = sshll.u32 %s202, 4
          %s204 = int_to_ptr.hbm [resolvable:$true] %s203
          %s205 = sshll.u32 [#allocation6], 4
          %s206 = int_to_ptr.vmem [resolvable:$true] %s205
          %211 = dma.hbm_to_vmem [thread:$0]  %s204, 512, %s206, [#allocation7], 128, 128, 8
        $region16: #{tpu_custom_call.1} parent=11 // pred_fallthru
          _
        // Predicated region
        $region17: #{tpu_custom_call.1} parent=11 // pred_check
          %p212 = pneg %p108
        $region18: #{tpu_custom_call.1} parent=11 // pred_check_branch
          %214 = sbr.rel (%p212) target = $region20
        $region19: #{tpu_custom_call.1} parent=11 // pred_region
          %p215 = scmp.lt.s32.totalorder %s28, 0
          %s216 = scalar_select %p215, %s28, 0
          %s217 = scalar_lea.vmem %s2, %s216
        $region20: #{tpu_custom_call.1} parent=11 // pred_fallthru
          _
        // Predicated region
        $region21: #{tpu_custom_call.1} parent=11 // pred_check
          %p218 = pneg %p134
        $region22: #{tpu_custom_call.1} parent=11 // pred_check_branch
          %220 = sbr.rel (%p218) target = $region24
        $region23: #{tpu_custom_call.1} parent=11 // pred_region
          %s221 = smul.u32 8, %s28
          %223 = vsyncadd [#allocation7], 0
          %s224 = smul.addr %s221, 8
          %s225 = scalar_lea.hbm %s3, %s224
          %s226 = sshll.u32 %s225, 4
          %s227 = int_to_ptr.hbm [resolvable:$true] %s226
          %s228 = sshll.u32 [#allocation8], 4
          %s229 = int_to_ptr.vmem [resolvable:$true] %s228
          %234 = dma.hbm_to_vmem [thread:$0]  %s227, 1024, %s229, [#allocation7], 128, 128, 8
        $region24: #{tpu_custom_call.1} parent=11 // pred_fallthru
          _
        // Predicated region
        $region25: #{tpu_custom_call.1} parent=11 // pred_check
          %p235 = pneg %p155
        $region26: #{tpu_custom_call.1} parent=11 // pred_check_branch
          %237 = sbr.rel (%p235) target = $region28
        $region27: #{tpu_custom_call.1} parent=11 // pred_region
          _
        $region28: #{tpu_custom_call.1} parent=11 // pred_fallthru
          _
      $region12: #{tpu_custom_call.1} parent=5 // pred_fallthru
        _
      %p238 = scmp.lt.s32.totalorder %s18, 2
      // Predicated region
      $region29: #{tpu_custom_call.1} parent=5 // pred_check
        %p239 = pneg %p238
      $region30: #{tpu_custom_call.1} parent=5 // pred_check_branch
        %241 = sbr.rel (%p239) target = $region32
      $region31: #{tpu_custom_call.1} parent=5 // pred_region
        // Predicated region
        $region33: #{tpu_custom_call.1} parent=31 // pred_check
          %p242 = pneg %p50
        $region34: #{tpu_custom_call.1} parent=31 // pred_check_branch
          %244 = sbr.rel (%p242) target = $region36
        $region35: #{tpu_custom_call.1} parent=31 // pred_region
          %s245 = sand.u32 %s40, 1
          %s246 = scalar_lea.sflag [#allocation4], %s245
          %s247 = sand.u32 %s40, 1
          %s248 = smul.addr %s247, 8
          %s249 = scalar_lea.vmem [#allocation3], %s248
          %251 = vsyncadd %s246, 0
          %s252 = smul.addr %s25, 8
          %s253 = scalar_lea.hbm %s0, %s252
          %s255 = sshll.u32 %s253, 4
          %s256 = int_to_ptr.hbm [resolvable:$true] %s255
          %s257 = sshll.u32 %s249, 4
          %s258 = int_to_ptr.vmem [resolvable:$true] %s257
          %260 = dma.hbm_to_vmem [thread:$0]  %s256, 128, %s258, %s246
        $region36: #{tpu_custom_call.1} parent=31 // pred_fallthru
          _
      $region32: #{tpu_custom_call.1} parent=5 // pred_fallthru
        _
      %p261 = scmp.le.s32.totalorder 1, %s18
      %p262 = scmp.lt.s32.totalorder %s18, 3
      %p263 = pnand %p261, %p262
      %p264 = pneg %p263
      // Predicated region
      $region37: #{tpu_custom_call.1} parent=5 // pred_check
        _
      $region38: #{tpu_custom_call.1} parent=5 // pred_check_branch
        %266 = sbr.rel (%p263) target = $region40
      $region39: #{tpu_custom_call.1} parent=5 // pred_region
        %s267 = ssub.s32 %s18, 1
        %s268 = sand.u32 %s43, 1
        %s269 = scalar_lea.sflag [#allocation4], %s268
        %s270 = sand.u32 %s43, 1
        %s271 = smul.addr %s270, 8
        %s272 = scalar_lea.vmem [#allocation3], %s271
        // Predicated region
        $region41: #{tpu_custom_call.1} parent=39 // pred_check
          %p273 = pneg %p56
        $region42: #{tpu_custom_call.1} parent=39 // pred_check_branch
          %275 = sbr.rel (%p273) target = $region44
        $region43: #{tpu_custom_call.1} parent=39 // pred_region
          %277 = dma.done %s269, 128
        $region44: #{tpu_custom_call.1} parent=39 // pred_fallthru
          _
        // Predicated region
        $region45: #{tpu_custom_call.1} parent=39 // pred_check
          %p278 = pneg %p82
        $region46: #{tpu_custom_call.1} parent=39 // pred_check_branch
          %280 = sbr.rel (%p278) target = $region48
        $region47: #{tpu_custom_call.1} parent=39 // pred_region
          %282 = dma.done [#allocation7], 512
        $region48: #{tpu_custom_call.1} parent=39 // pred_fallthru
          _
        // Predicated region
        $region49: #{tpu_custom_call.1} parent=39 // pred_check
          %p283 = pneg %p134
        $region50: #{tpu_custom_call.1} parent=39 // pred_check_branch
          %285 = sbr.rel (%p283) target = $region52
        $region51: #{tpu_custom_call.1} parent=39 // pred_region
          %287 = dma.done [#allocation7], 1024
        $region52: #{tpu_custom_call.1} parent=39 // pred_fallthru
          _
        %s288 = sand.u32 %s43, 1
        %s289 = scalar_lea.sflag [#allocation4], %s288
        %s290 = sand.u32 %s43, 1
        %s291 = smul.addr %s290, 8
        %s292 = scalar_lea.vmem [#allocation3], %s291
        %p293 = pneg %p56
        %p294 = pneg %p53
        %p295 = pneg %p82
        %p296 = pneg %p79
        %p297 = scmp.lt.s32.totalorder %s28, 0
        %s298 = scalar_select %p297, %s28, 0
        %s299 = scalar_lea.vmem %s2, %s298
        %p300 = pneg %p108
        %p301 = pneg %p105
        %p302 = pneg %p134
        %p303 = pneg %p131
        %p304 = pneg %p155
        %p305 = pneg %p152
        %p306 = pneg %p181
        %p307 = pneg %p178
        %s308 = sand.u32 %s168, 1
        %s309 = scalar_lea.sflag [#allocation5], %s308
        %s310 = sand.u32 %s168, 1
        %s311 = smul.addr %s310, 8
        %s312 = scalar_lea.vmem [#allocation9], %s311
        %p313 = scmp.lt.s32.totalorder %s28, 0
        %s314 = scalar_select %p313, %s28, 0
        %s315 = scalar_lea.vmem %s2, %s314
        %s316 = smul.u32 8, %s28
        %p317 = scmp.eq.s32.totalorder %s28, 0
        // Predicated region
        $region53: #{tpu_custom_call.1} parent=39 // pred_check
          %p318 = pneg %p317
        $region54: #{tpu_custom_call.1} parent=39 // pred_check_branch
          %320 = sbr.rel (%p318) target = $region56
        $region55: #{tpu_custom_call.1} parent=39 // pred_region
          %321 = vst [vmem:[#allocation2] sm:$0xff] 0.0
        $region56: #{tpu_custom_call.1} parent=39 // pred_fallthru
          _
        %v322 = vld [vmem:[%s272] sm:$0xff]
        %v323 = vld [vmem:[#allocation6] sm:$0xff]
        %v324 = vld [vmem:[#allocation6 + $0x8] sm:$0xff]
        %v325 = vld [vmem:[#allocation6 + $0x10] sm:$0xff]
        %v326 = vld [vmem:[#allocation6 + $0x18] sm:$0xff]
        %v327 = vld [vmem:[%s315] sm:$0x1]
        %v329 = vperm.slane %v327, 0
        %vm331 = vcmask 261120
        %v333 = vsel %vm331, %v322, 0
        %335 = vmatpush.msra.mxu0 0.0
        %336 = vmatpush.msra.mxu0 0.0
        %337 = vmatpush.msra.mxu0 0.0
        %338 = vmatpush.msra.mxu0 0.0
        %339 = vmatpush.msra.mxu0 0.0
        %340 = vmatpush.msra.mxu0 0.0
        %341 = vmatpush.msra.mxu0 0.0
        %342 = vmatpush.msra.mxu0 0.0
        %343 = vmatpush.msra.mxu0 0.0
        %344 = vmatpush.msra.mxu0 0.0
        %345 = vmatpush.msra.mxu0 0.0
        %346 = vmatpush.msra.mxu0 0.0
        %347 = vmatpush.msra.mxu0 %v326
        %348 = vmatpush.msra.mxu0 %v325
        %349 = vmatpush.msra.mxu0 %v324
        %350 = vmatpush.msra.mxu0 %v323
        %351 = vmatmul.f32.gmra.mxu0 %v333
        %v352 = vpop.f32.mrf.mxu0
        %v353 = vadd.f32 %v329, %v352
        %354 = vdwg.mxu0
        %v355 = vmax.f32 %v353, 0.0
        %v356 = vld [vmem:[#allocation2] sm:$0xff]
        %v357 = vld [vmem:[#allocation8] sm:$0xff]
        %v358 = vld [vmem:[#allocation8 + $0x8] sm:$0xff]
        %v359 = vld [vmem:[#allocation8 + $0x10] sm:$0xff]
        %v360 = vld [vmem:[#allocation8 + $0x18] sm:$0xff]
        %v361 = vld [vmem:[#allocation8 + $0x20] sm:$0xff]
        %v362 = vld [vmem:[#allocation8 + $0x28] sm:$0xff]
        %v363 = vld [vmem:[#allocation8 + $0x30] sm:$0xff]
        %v364 = vld [vmem:[#allocation8 + $0x38] sm:$0xff]
        %vm365 = vcmask 523264
        %v367 = vsel %vm365, %v355, 0
        %369 = vmatpush.msra.mxu0 0.0
        %370 = vmatpush.msra.mxu0 0.0
        %371 = vmatpush.msra.mxu0 0.0
        %372 = vmatpush.msra.mxu0 0.0
        %373 = vmatpush.msra.mxu0 0.0
        %374 = vmatpush.msra.mxu0 0.0
        %375 = vmatpush.msra.mxu0 0.0
        %376 = vmatpush.msra.mxu0 0.0
        %377 = vmatpush.msra.mxu0 %v364
        %378 = vmatpush.msra.mxu0 %v363
        %379 = vmatpush.msra.mxu0 %v362
        %380 = vmatpush.msra.mxu0 %v361
        %381 = vmatpush.msra.mxu0 %v360
        %382 = vmatpush.msra.mxu0 %v359
        %383 = vmatpush.msra.mxu0 %v358
        %384 = vmatpush.msra.mxu0 %v357
        %385 = vmatmul.f32.gmra.mxu0 %v367
        %v386 = vpop.f32.mrf.mxu0
        %v387 = vadd.f32 0.0, %v386
        %388 = vdwg.mxu0
        %v389 = vadd.f32 %v356, %v387
        %390 = vst [vmem:[#allocation2] sm:$0xff] %v389
        // Predicated region
        $region57: #{tpu_custom_call.1} parent=39 // pred_check
          %p391 = pneg %p317
        $region58: #{tpu_custom_call.1} parent=39 // pred_check_branch
          %393 = sbr.rel (%p391) target = $region60
        $region59: #{tpu_custom_call.1} parent=39 // pred_region
          %v394 = vld [vmem:[#allocation2] sm:$0xff]
          %v395 = vld [vmem:[%s4] sm:$0x1]
          %v397 = vperm.slane %v395, 0
          %v399 = vadd.f32 %v394, %v397
          %400 = vst [vmem:[%s312] sm:$0xff] %v399
        $region60: #{tpu_custom_call.1} parent=39 // pred_fallthru
          _
        %s401 = sand.u32 %s168, 1
        %s402 = scalar_lea.sflag [#allocation5], %s401
        %s403 = sand.u32 %s168, 1
        %s404 = smul.addr %s403, 8
        %s405 = scalar_lea.vmem [#allocation9], %s404
        // Predicated region
        $region61: #{tpu_custom_call.1} parent=39 // pred_check
          %p406 = pneg %p178
        $region62: #{tpu_custom_call.1} parent=39 // pred_check_branch
          %408 = sbr.rel (%p406) target = $region64
        $region63: #{tpu_custom_call.1} parent=39 // pred_region
          %410 = vsyncadd %s402, 0
          %s411 = smul.addr %s27, 8
          %s412 = scalar_lea.hbm %s5, %s411
          %s414 = sshll.u32 %s405, 4
          %s415 = int_to_ptr.vmem [resolvable:$true] %s414
          %s416 = sshll.u32 %s412, 4
          %s417 = int_to_ptr.hbm [resolvable:$true] %s416
          %419 = dma.vmem_to_hbm [thread:$0]  %s415, 128, %s417, %s402
        $region64: #{tpu_custom_call.1} parent=39 // pred_fallthru
          _
      $region40: #{tpu_custom_call.1} parent=5 // pred_fallthru
        _
      %p420 = scmp.le.s32.totalorder 2, %s18
      // Predicated region
      $region65: #{tpu_custom_call.1} parent=5 // pred_check
        %p421 = pneg %p420
      $region66: #{tpu_custom_call.1} parent=5 // pred_check_branch
        %423 = sbr.rel (%p421) target = $region68
      $region67: #{tpu_custom_call.1} parent=5 // pred_region
        %s424 = ssub.s32 %s18, 2
        // Predicated region
        $region69: #{tpu_custom_call.1} parent=67 // pred_check
          %p425 = pneg %p184
        $region70: #{tpu_custom_call.1} parent=67 // pred_check_branch
          %427 = sbr.rel (%p425) target = $region72
        $region71: #{tpu_custom_call.1} parent=67 // pred_region
          %s428 = sand.u32 %s169, 1
          %s429 = scalar_lea.sflag [#allocation5], %s428
          %s430 = sand.u32 %s169, 1
          %s431 = smul.addr %s430, 8
          %s432 = scalar_lea.vmem [#allocation9], %s431
          %434 = dma.done %s429, 128
        $region72: #{tpu_custom_call.1} parent=67 // pred_fallthru
          _
      $region68: #{tpu_custom_call.1} parent=5 // pred_fallthru
        _
    $region6: #{tpu_custom_call.1} parent=1 // loop_footer
      %s22 = sadd.s32 1, %s18
    $region7: #{tpu_custom_call.1} parent=1 // loop_footer_branch
      %17 = sbr.rel target = $region3
    $region8: #{tpu_custom_call.1} parent=1 // loop_exit
      _
    %435 = vsyncpa [#allocation4], 1
    %s436 = scalar_lea.sflag [#allocation4], 1
    %437 = vsyncpa %s436, 1
    %438 = vsyncpa [#allocation7], 1
    %439 = vsyncpa [#allocation5], 1
    %s440 = scalar_lea.sflag [#allocation5], 1
    %441 = vsyncpa %s440, 1

// kernel: tpu_custom_call.1
$region0: #{tpu_custom_call.1}
  #allocation0 [shape = 'u32[]', space=smem, size = 0x4, offset = 0x4, fixed_abs, tag = 'smem constant byte address 0x4 - core index']
  #allocation1 [shape = 'u32[72,128]{1,0:T(1,128)}', space=vmem, size = 0x9000, scoped, tag = 'internal scratch']
  #allocation2 [shape = 'f32[8,128]{1,0:T(8,128)}', space=vmem, size = 0x1000, scoped, tag = 'scratch operand']
  %s0 = inlined_call_operand.hbm [shape: f32[16,32], index: 0, kind: input, shape index: {}]
  %s1 = inlined_call_operand.hbm [shape: f32[32,64], index: 1, kind: input, shape index: {}]
  %s2 = inlined_call_operand.vmem [shape: f32[1,64], index: 2, kind: input, shape index: {}]
  %s3 = inlined_call_operand.hbm [shape: f32[64,128], index: 3, kind: input, shape index: {}]
  %s4 = inlined_call_operand.vmem [shape: f32[1,128], index: 4, kind: input, shape index: {}]
  %s5 = inlined_call_operand.hbm [shape: f32[16,128], index: 5, kind: output, shape index: {}]
  %s6 = sld [smem:[#allocation0]]
  $region73: #{tpu_custom_call.1} parent=0
    _
  %s8 = ssub.s32 1, %s6
  %s9 = scalar_select 0, %s8, %s6
  $region1: #{tpu_custom_call.1} parent=0
    #allocation3 [shape = 'u8[8192]{0}', space=vmem, size = 0x2000, scoped, tag = 'input window, operand 0']
    #allocation4 [shape = 's32[2]{0}', space=sflag, size = 0x8, scoped, tag = 'scoped memory for tpu_custom_call.1']
    #allocation5 [shape = 's32[2]{0}', space=sflag, size = 0x8, scoped, tag = 'scoped memory for tpu_custom_call.1']
    #allocation6 [shape = 'u8[16384]{0}', space=vmem, size = 0x4000, scoped, tag = 'input window, operand 1, single buffered']
    #allocation7 [shape = 's32[1]{0}', space=sflag, size = 0x4, scoped, tag = 'scoped memory for tpu_custom_call.1']
    #allocation8 [shape = 'u8[32768]{0}', space=vmem, size = 0x8000, scoped, tag = 'input window, operand 3, single buffered']
    #allocation9 [shape = 'u8[8192]{0}', space=vmem, size = 0x2000, scoped, tag = 'output window, operand 0']
    %10 = vsyncpa [#allocation4], 0
    %s11 = scalar_lea.sflag [#allocation4], 1
    %12 = vsyncpa %s11, 0
    %13 = vsyncpa [#allocation7], 0
    %14 = vsyncpa [#allocation5], 0
    %s15 = scalar_lea.sflag [#allocation5], 1
    %16 = vsyncpa %s15, 0
    loop: start=0, step=1, limit=4
    $region2: #{tpu_custom_call.1} parent=1 // loop_pre_header
      _
    $region3: #{tpu_custom_call.1} parent=1 // loop_header
      %s18 = sphi 0, %s22
      %p19 = scmp.ge.s32.totalorder %s18, 4
      %s25 = sphi 0, %s37
      %s26 = sphi 0, %s33
      %s27 = sphi 0, %s25
      %s28 = sphi 0, %s26
      %s29 = sphi 0, %s27
      %s30 = sphi 0, %s28
      %s40 = sphi 0, %s42
      %s43 = sphi 0, %s40
      %s44 = sphi 0, %s43
      %s60 = sphi 0, %s44
      %s66 = sphi 0, %s68
      %s69 = sphi 0, %s66
      %s70 = sphi 0, %s69
      %s86 = sphi 0, %s70
      %s92 = sphi 0, %s94
      %s95 = sphi 0, %s92
      %s96 = sphi 0, %s95
      %s112 = sphi 0, %s96
      %s118 = sphi 0, %s120
      %s121 = sphi 0, %s118
      %s122 = sphi 0, %s121
      %s138 = sphi 0, %s122
      %s142 = sphi 0, %s142
      %s144 = sphi 0, %s142
      %s145 = sphi 0, %s144
      %s159 = sphi 0, %s145
      %s165 = sphi 0, %s167
      %s168 = sphi 0, %s165
      %s169 = sphi 0, %s168
      %s185 = sphi 0, %s169
    $region4: #{tpu_custom_call.1} parent=1 // loop_header_branch
      %21 = sbr.rel (%p19) target = $region8
    $region5: #{tpu_custom_call.1} parent=1 // loop_body
      %s23 = ssub.s32 %s18, 1
      %s24 = ssub.s32 %s18, 2
      %s31 = sadd.s32 1, %s26
      %p32 = scmp.ge.s32.totalorder %s31, 1
      %s33 = scalar_select %p32, 0, %s31
      %s34 = sadd.s32 1, %s25
      %s35 = scalar_select %p32, %s34, %s25
      %p36 = scmp.ge.s32.totalorder %s35, 2
      %s37 = scalar_select %p36, 0, %s35
      %s38 = ssub.s32 %s25, %s37
      %p39 = scmp.eq.s32.totalorder %s38, 0
      %s41 = sadd.s32 %s40, 1
      %s42 = scalar_select %p39, %s40, %s41
      %p45 = pneg %p39
      %p46 = scmp.eq.s32.totalorder %s18, 1
      %p47 = por %p45, %p46
      %p48 = scmp.ne.s32.totalorder %s40, %s43
      %p49 = scmp.eq.s32.totalorder %s18, 0
      %p50 = por %p48, %p49
      %p51 = scmp.ne.s32.totalorder %s40, %s43
      %p52 = scmp.eq.s32.totalorder %s23, 1
      %p53 = por %p51, %p52
      %p54 = scmp.ne.s32.totalorder %s43, %s44
      %p55 = scmp.eq.s32.totalorder %s23, 0
      %p56 = por %p54, %p55
      %p57 = scmp.ne.s32.totalorder %s43, %s44
      %p58 = scmp.eq.s32.totalorder %s24, 1
      %p59 = por %p57, %p58
      %p61 = scmp.ne.s32.totalorder %s44, %s60
      %p62 = scmp.eq.s32.totalorder %s24, 0
      %p63 = por %p61, %p62
      %s64 = ssub.s32 %s26, %s33
      %p65 = scmp.eq.s32.totalorder %s64, 0
      %s67 = sadd.s32 %s66, 1
      %s68 = scalar_select %p65, %s66, %s67
      %p71 = pneg %p65
      %p72 = scmp.eq.s32.totalorder %s18, 1
      %p73 = por %p71, %p72
      %p74 = scmp.ne.s32.totalorder %s66, %s69
      %p75 = scmp.eq.s32.totalorder %s18, 0
      %p76 = por %p74, %p75
      %p77 = scmp.ne.s32.totalorder %s66, %s69
      %p78 = scmp.eq.s32.totalorder %s23, 1
      %p79 = por %p77, %p78
      %p80 = scmp.ne.s32.totalorder %s69, %s70
      %p81 = scmp.eq.s32.totalorder %s23, 0
      %p82 = por %p80, %p81
      %p83 = scmp.ne.s32.totalorder %s69, %s70
      %p84 = scmp.eq.s32.totalorder %s24, 1
      %p85 = por %p83, %p84
      %p87 = scmp.ne.s32.totalorder %s70, %s86
      %p88 = scmp.eq.s32.totalorder %s24, 0
      %p89 = por %p87, %p88
      %s90 = ssub.s32 %s26, %s33
      %p91 = scmp.eq.s32.totalorder %s90, 0
      %s93 = sadd.s32 %s92, 1
      %s94 = scalar_select %p91, %s92, %s93
      %p97 = pneg %p91
      %p98 = scmp.eq.s32.totalorder %s18, 1
      %p99 = por %p97, %p98
      %p100 = scmp.ne.s32.totalorder %s92, %s95
      %p101 = scmp.eq.s32.totalorder %s18, 0
      %p102 = por %p100, %p101
      %p103 = scmp.ne.s32.totalorder %s92, %s95
      %p104 = scmp.eq.s32.totalorder %s23, 1
      %p105 = por %p103, %p104
      %p106 = scmp.ne.s32.totalorder %s95, %s96
      %p107 = scmp.eq.s32.totalorder %s23, 0
      %p108 = por %p106, %p107
      %p109 = scmp.ne.s32.totalorder %s95, %s96
      %p110 = scmp.eq.s32.totalorder %s24, 1
      %p111 = por %p109, %p110
      %p113 = scmp.ne.s32.totalorder %s96, %s112
      %p114 = scmp.eq.s32.totalorder %s24, 0
      %p115 = por %p113, %p114
      %s116 = ssub.s32 %s26, %s33
      %p117 = scmp.eq.s32.totalorder %s116, 0
      %s119 = sadd.s32 %s118, 1
      %s120 = scalar_select %p117, %s118, %s119
      %p123 = pneg %p117
      %p124 = scmp.eq.s32.totalorder %s18, 1
      %p125 = por %p123, %p124
      %p126 = scmp.ne.s32.totalorder %s118, %s121
      %p127 = scmp.eq.s32.totalorder %s18, 0
      %p128 = por %p126, %p127
      %p129 = scmp.ne.s32.totalorder %s118, %s121
      %p130 = scmp.eq.s32.totalorder %s23, 1
      %p131 = por %p129, %p130
      %p132 = scmp.ne.s32.totalorder %s121, %s122
      %p133 = scmp.eq.s32.totalorder %s23, 0
      %p134 = por %p132, %p133
      %p135 = scmp.ne.s32.totalorder %s121, %s122
      %p136 = scmp.eq.s32.totalorder %s24, 1
      %p137 = por %p135, %p136
      %p139 = scmp.ne.s32.totalorder %s122, %s138
      %p140 = scmp.eq.s32.totalorder %s24, 0
      %p141 = por %p139, %p140
      %s143 = sadd.s32 %s142, 1
      %p146 = scmp.eq.s32.totalorder %s18, 1
      %p147 = scmp.ne.s32.totalorder %s142, %s144
      %p148 = scmp.eq.s32.totalorder %s18, 0
      %p149 = por %p147, %p148
      %p150 = scmp.ne.s32.totalorder %s142, %s144
      %p151 = scmp.eq.s32.totalorder %s23, 1
      %p152 = por %p150, %p151
      %p153 = scmp.ne.s32.totalorder %s144, %s145
      %p154 = scmp.eq.s32.totalorder %s23, 0
      %p155 = por %p153, %p154
      %p156 = scmp.ne.s32.totalorder %s144, %s145
      %p157 = scmp.eq.s32.totalorder %s24, 1
      %p158 = por %p156, %p157
      %p160 = scmp.ne.s32.totalorder %s145, %s159
      %p161 = scmp.eq.s32.totalorder %s24, 0
      %p162 = por %p160, %p161
      %s163 = ssub.s32 %s25, %s37
      %p164 = scmp.eq.s32.totalorder %s163, 0
      %s166 = sadd.s32 %s165, 1
      %s167 = scalar_select %p164, %s165, %s166
      %p170 = pneg %p164
      %p171 = scmp.eq.s32.totalorder %s18, 1
      %p172 = por %p170, %p171
      %p173 = scmp.ne.s32.totalorder %s165, %s168
      %p174 = scmp.eq.s32.totalorder %s18, 0
      %p175 = por %p173, %p174
      %p176 = scmp.ne.s32.totalorder %s165, %s168
      %p177 = scmp.eq.s32.totalorder %s23, 1
      %p178 = por %p176, %p177
      %p179 = scmp.ne.s32.totalorder %s168, %s169
      %p180 = scmp.eq.s32.totalorder %s23, 0
      %p181 = por %p179, %p180
      %p182 = scmp.ne.s32.totalorder %s168, %s169
      %p183 = scmp.eq.s32.totalorder %s24, 1
      %p184 = por %p182, %p183
      %p186 = scmp.ne.s32.totalorder %s169, %s185
      %p187 = scmp.eq.s32.totalorder %s24, 0
      %p188 = por %p186, %p187
      %p189 = scmp.le.s32.totalorder 1, %s18
      %p190 = scmp.lt.s32.totalorder %s18, 3
      %p191 = pnand %p189, %p190
      %p192 = pneg %p191
      // Predicated region
      $region9: #{tpu_custom_call.1} parent=5 // pred_check
        _
      $region10: #{tpu_custom_call.1} parent=5 // pred_check_branch
        %194 = sbr.rel (%p191) target = $region12
      $region11: #{tpu_custom_call.1} parent=5 // pred_region
        %s195 = ssub.s32 %s18, 1
        // Predicated region
        $region13: #{tpu_custom_call.1} parent=11 // pred_check
          %p196 = pneg %p82
        $region14: #{tpu_custom_call.1} parent=11 // pred_check_branch
          %198 = sbr.rel (%p196) target = $region16
        $region15: #{tpu_custom_call.1} parent=11 // pred_region
          %200 = vsyncadd [#allocation7], 0
          %s201 = smul.addr %s28, 8
          %s202 = scalar_lea.hbm %s1, %s201
          %s203 = sshll.u32 %s202, 4
          %s204 = int_to_ptr.hbm [resolvable:$true] %s203
          %s205 = sshll.u32 [#allocation6], 4
          %s206 = int_to_ptr.vmem [resolvable:$true] %s205
          %211 = dma.hbm_to_vmem [thread:$0]  %s204, 512, %s206, [#allocation7], 128, 128, 8
        $region16: #{tpu_custom_call.1} parent=11 // pred_fallthru
          _
        // Predicated region
        $region17: #{tpu_custom_call.1} parent=11 // pred_check
          %p212 = pneg %p108
        $region18: #{tpu_custom_call.1} parent=11 // pred_check_branch
          %214 = sbr.rel (%p212) target = $region20
        $region19: #{tpu_custom_call.1} parent=11 // pred_region
          %p215 = scmp.lt.s32.totalorder %s28, 0
          %s216 = scalar_select %p215, %s28, 0
          %s217 = scalar_lea.vmem %s2, %s216
        $region20: #{tpu_custom_call.1} parent=11 // pred_fallthru
          _
        // Predicated region
        $region21: #{tpu_custom_call.1} parent=11 // pred_check
          %p218 = pneg %p134
        $region22: #{tpu_custom_call.1} parent=11 // pred_check_branch
          %220 = sbr.rel (%p218) target = $region24
        $region23: #{tpu_custom_call.1} parent=11 // pred_region
          %s221 = smul.u32 8, %s28
          %223 = vsyncadd [#allocation7], 0
          %s224 = smul.addr %s221, 8
          %s225 = scalar_lea.hbm %s3, %s224
          %s226 = sshll.u32 %s225, 4
          %s227 = int_to_ptr.hbm [resolvable:$true] %s226
          %s228 = sshll.u32 [#allocation8], 4
          %s229 = int_to_ptr.vmem [resolvable:$true] %s228
          %234 = dma.hbm_to_vmem [thread:$0]  %s227, 1024, %s229, [#allocation7], 128, 128, 8
        $region24: #{tpu_custom_call.1} parent=11 // pred_fallthru
          _
        // Predicated region
        $region25: #{tpu_custom_call.1} parent=11 // pred_check
          %p235 = pneg %p155
        $region26: #{tpu_custom_call.1} parent=11 // pred_check_branch
          %237 = sbr.rel (%p235) target = $region28
        $region27: #{tpu_custom_call.1} parent=11 // pred_region
          _
        $region28: #{tpu_custom_call.1} parent=11 // pred_fallthru
          _
      $region12: #{tpu_custom_call.1} parent=5 // pred_fallthru
        _
      %p238 = scmp.lt.s32.totalorder %s18, 2
      // Predicated region
      $region29: #{tpu_custom_call.1} parent=5 // pred_check
        %p239 = pneg %p238
      $region30: #{tpu_custom_call.1} parent=5 // pred_check_branch
        %241 = sbr.rel (%p239) target = $region32
      $region31: #{tpu_custom_call.1} parent=5 // pred_region
        // Predicated region
        $region33: #{tpu_custom_call.1} parent=31 // pred_check
          %p242 = pneg %p50
        $region34: #{tpu_custom_call.1} parent=31 // pred_check_branch
          %244 = sbr.rel (%p242) target = $region36
        $region35: #{tpu_custom_call.1} parent=31 // pred_region
          %s245 = sand.u32 %s40, 1
          %s246 = scalar_lea.sflag [#allocation4], %s245
          %s247 = sand.u32 %s40, 1
          %s248 = smul.addr %s247, 8
          %s249 = scalar_lea.vmem [#allocation3], %s248
          %251 = vsyncadd %s246, 0
          %s252 = smul.addr %s25, 8
          %s253 = scalar_lea.hbm %s0, %s252
          %s255 = sshll.u32 %s253, 4
          %s256 = int_to_ptr.hbm [resolvable:$true] %s255
          %s257 = sshll.u32 %s249, 4
          %s258 = int_to_ptr.vmem [resolvable:$true] %s257
          %260 = dma.hbm_to_vmem [thread:$0]  %s256, 128, %s258, %s246
        $region36: #{tpu_custom_call.1} parent=31 // pred_fallthru
          _
      $region32: #{tpu_custom_call.1} parent=5 // pred_fallthru
        _
      %p261 = scmp.le.s32.totalorder 1, %s18
      %p262 = scmp.lt.s32.totalorder %s18, 3
      %p263 = pnand %p261, %p262
      %p264 = pneg %p263
      // Predicated region
      $region37: #{tpu_custom_call.1} parent=5 // pred_check
        _
      $region38: #{tpu_custom_call.1} parent=5 // pred_check_branch
        %266 = sbr.rel (%p263) target = $region40
      $region39: #{tpu_custom_call.1} parent=5 // pred_region
        %s267 = ssub.s32 %s18, 1
        %s268 = sand.u32 %s43, 1
        %s269 = scalar_lea.sflag [#allocation4], %s268
        %s270 = sand.u32 %s43, 1
        %s271 = smul.addr %s270, 8
        %s272 = scalar_lea.vmem [#allocation3], %s271
        // Predicated region
        $region41: #{tpu_custom_call.1} parent=39 // pred_check
          %p273 = pneg %p56
        $region42: #{tpu_custom_call.1} parent=39 // pred_check_branch
          %275 = sbr.rel (%p273) target = $region44
        $region43: #{tpu_custom_call.1} parent=39 // pred_region
          %277 = dma.done %s269, 128
        $region44: #{tpu_custom_call.1} parent=39 // pred_fallthru
          _
        // Predicated region
        $region45: #{tpu_custom_call.1} parent=39 // pred_check
          %p278 = pneg %p82
        $region46: #{tpu_custom_call.1} parent=39 // pred_check_branch
          %280 = sbr.rel (%p278) target = $region48
        $region47: #{tpu_custom_call.1} parent=39 // pred_region
          %282 = dma.done [#allocation7], 512
        $region48: #{tpu_custom_call.1} parent=39 // pred_fallthru
          _
        // Predicated region
        $region49: #{tpu_custom_call.1} parent=39 // pred_check
          %p283 = pneg %p134
        $region50: #{tpu_custom_call.1} parent=39 // pred_check_branch
          %285 = sbr.rel (%p283) target = $region52
        $region51: #{tpu_custom_call.1} parent=39 // pred_region
          %287 = dma.done [#allocation7], 1024
        $region52: #{tpu_custom_call.1} parent=39 // pred_fallthru
          _
        %s288 = sand.u32 %s43, 1
        %s289 = scalar_lea.sflag [#allocation4], %s288
        %s290 = sand.u32 %s43, 1
        %s291 = smul.addr %s290, 8
        %s292 = scalar_lea.vmem [#allocation3], %s291
        %p293 = pneg %p56
        %p294 = pneg %p53
        %p295 = pneg %p82
        %p296 = pneg %p79
        %p297 = scmp.lt.s32.totalorder %s28, 0
        %s298 = scalar_select %p297, %s28, 0
        %s299 = scalar_lea.vmem %s2, %s298
        %p300 = pneg %p108
        %p301 = pneg %p105
        %p302 = pneg %p134
        %p303 = pneg %p131
        %p304 = pneg %p155
        %p305 = pneg %p152
        %p306 = pneg %p181
        %p307 = pneg %p178
        %s308 = sand.u32 %s168, 1
        %s309 = scalar_lea.sflag [#allocation5], %s308
        %s310 = sand.u32 %s168, 1
        %s311 = smul.addr %s310, 8
        %s312 = scalar_lea.vmem [#allocation9], %s311
        %p313 = scmp.lt.s32.totalorder %s28, 0
        %s314 = scalar_select %p313, %s28, 0
        %s315 = scalar_lea.vmem %s2, %s314
        %s316 = smul.u32 8, %s28
        %p317 = scmp.eq.s32.totalorder %s28, 0
        // Predicated region
        $region53: #{tpu_custom_call.1} parent=39 // pred_check
          %p318 = pneg %p317
        $region54: #{tpu_custom_call.1} parent=39 // pred_check_branch
          %320 = sbr.rel (%p318) target = $region56
        $region55: #{tpu_custom_call.1} parent=39 // pred_region
          %321 = vst [vmem:[#allocation2] sm:$0xff] 0.0
        $region56: #{tpu_custom_call.1} parent=39 // pred_fallthru
          _
        %v322 = vld [vmem:[%s272] sm:$0xff]
        %v323 = vld [vmem:[#allocation6] sm:$0xff]
        %v324 = vld [vmem:[#allocation6 + $0x8] sm:$0xff]
        %v325 = vld [vmem:[#allocation6 + $0x10] sm:$0xff]
        %v326 = vld [vmem:[#allocation6 + $0x18] sm:$0xff]
        %v327 = vld [vmem:[%s315] sm:$0x1]
        %v329 = vperm.slane %v327, 0
        %vm331 = vcmask 261120
        %v333 = vsel %vm331, %v322, 0
        %335 = vmatpush.msra.mxu0 0.0
        %336 = vmatpush.msra.mxu0 0.0
        %337 = vmatpush.msra.mxu0 0.0
        %338 = vmatpush.msra.mxu0 0.0
        %339 = vmatpush.msra.mxu0 0.0
        %340 = vmatpush.msra.mxu0 0.0
        %341 = vmatpush.msra.mxu0 0.0
        %342 = vmatpush.msra.mxu0 0.0
        %343 = vmatpush.msra.mxu0 0.0
        %344 = vmatpush.msra.mxu0 0.0
        %345 = vmatpush.msra.mxu0 0.0
        %346 = vmatpush.msra.mxu0 0.0
        %347 = vmatpush.msra.mxu0 %v326
        %348 = vmatpush.msra.mxu0 %v325
        %349 = vmatpush.msra.mxu0 %v324
        %350 = vmatpush.msra.mxu0 %v323
        %351 = vmatmul.f32.gmra.mxu0 %v333
        %v352 = vpop.f32.mrf.mxu0
        %v353 = vadd.f32 %v329, %v352
        %354 = vdwg.mxu0
        %v355 = vmax.f32 %v353, 0.0
        %v356 = vld [vmem:[#allocation2] sm:$0xff]
        %v357 = vld [vmem:[#allocation8] sm:$0xff]
        %v358 = vld [vmem:[#allocation8 + $0x8] sm:$0xff]
        %v359 = vld [vmem:[#allocation8 + $0x10] sm:$0xff]
        %v360 = vld [vmem:[#allocation8 + $0x18] sm:$0xff]
        %v361 = vld [vmem:[#allocation8 + $0x20] sm:$0xff]
        %v362 = vld [vmem:[#allocation8 + $0x28] sm:$0xff]
        %v363 = vld [vmem:[#allocation8 + $0x30] sm:$0xff]
        %v364 = vld [vmem:[#allocation8 + $0x38] sm:$0xff]
        %vm365 = vcmask 523264
        %v367 = vsel %vm365, %v355, 0
        %369 = vmatpush.msra.mxu0 0.0
        %370 = vmatpush.msra.mxu0 0.0
        %371 = vmatpush.msra.mxu0 0.0
        %372 = vmatpush.msra.mxu0 0.0
        %373 = vmatpush.msra.mxu0 0.0
        %374 = vmatpush.msra.mxu0 0.0
        %375 = vmatpush.msra.mxu0 0.0
        %376 = vmatpush.msra.mxu0 0.0
        %377 = vmatpush.msra.mxu0 %v364
        %378 = vmatpush.msra.mxu0 %v363
        %379 = vmatpush.msra.mxu0 %v362
        %380 = vmatpush.msra.mxu0 %v361
        %381 = vmatpush.msra.mxu0 %v360
        %382 = vmatpush.msra.mxu0 %v359
        %383 = vmatpush.msra.mxu0 %v358
        %384 = vmatpush.msra.mxu0 %v357
        %385 = vmatmul.f32.gmra.mxu0 %v367
        %v386 = vpop.f32.mrf.mxu0
        %v387 = vadd.f32 0.0, %v386
        %388 = vdwg.mxu0
        %v389 = vadd.f32 %v356, %v387
        %390 = vst [vmem:[#allocation2] sm:$0xff] %v389
        // Predicated region
        $region57: #{tpu_custom_call.1} parent=39 // pred_check
          %p391 = pneg %p317
        $region58: #{tpu_custom_call.1} parent=39 // pred_check_branch
          %393 = sbr.rel (%p391) target = $region60
        $region59: #{tpu_custom_call.1} parent=39 // pred_region
          %v394 = vld [vmem:[#allocation2] sm:$0xff]
          %v395 = vld [vmem:[%s4] sm:$0x1]
          %v397 = vperm.slane %v395, 0
          %v399 = vadd.f32 %v394, %v397
          %400 = vst [vmem:[%s312] sm:$0xff] %v399
        $region60: #{tpu_custom_call.1} parent=39 // pred_fallthru
          _
        %s401 = sand.u32 %s168, 1
        %s402 = scalar_lea.sflag [#allocation5], %s401
        %s403 = sand.u32 %s168, 1
        %s404 = smul.addr %s403, 8
        %s405 = scalar_lea.vmem [#allocation9], %s404
        // Predicated region
        $region61: #{tpu_custom_call.1} parent=39 // pred_check
          %p406 = pneg %p178
        $region62: #{tpu_custom_call.1} parent=39 // pred_check_branch
          %408 = sbr.rel (%p406) target = $region64
        $region63: #{tpu_custom_call.1} parent=39 // pred_region
          %410 = vsyncadd %s402, 0
          %s411 = smul.addr %s27, 8
          %s412 = scalar_lea.hbm %s5, %s411
          %s414 = sshll.u32 %s405, 4
          %s415 = int_to_ptr.vmem [resolvable:$true] %s414
          %s416 = sshll.u32 %s412, 4
          %s417 = int_to_ptr.hbm [resolvable:$true] %s416
          %419 = dma.vmem_to_hbm [thread:$0]  %s415, 128, %s417, %s402
        $region64: #{tpu_custom_call.1} parent=39 // pred_fallthru
          _
      $region40: #{tpu_custom_call.1} parent=5 // pred_fallthru
        _
      %p420 = scmp.le.s32.totalorder 2, %s18
      // Predicated region
      $region65: #{tpu_custom_call.1} parent=5 // pred_check
        %p421 = pneg %p420
      $region66: #{tpu_custom_call.1} parent=5 // pred_check_branch
        %423 = sbr.rel (%p421) target = $region68
      $region67: #{tpu_custom_call.1} parent=5 // pred_region
        %s424 = ssub.s32 %s18, 2
        // Predicated region
        $region69: #{tpu_custom_call.1} parent=67 // pred_check
          %p425 = pneg %p184
        $region70: #{tpu_custom_call.1} parent=67 // pred_check_branch
          %427 = sbr.rel (%p425) target = $region72
        $region71: #{tpu_custom_call.1} parent=67 // pred_region
          %s428 = sand.u32 %s169, 1
          %s429 = scalar_lea.sflag [#allocation5], %s428
          %s430 = sand.u32 %s169, 1
          %s431 = smul.addr %s430, 8
          %s432 = scalar_lea.vmem [#allocation9], %s431
          %434 = dma.done %s429, 128
        $region72: #{tpu_custom_call.1} parent=67 // pred_fallthru
          _
      $region68: #{tpu_custom_call.1} parent=5 // pred_fallthru
        _
    $region6: #{tpu_custom_call.1} parent=1 // loop_footer
      %s22 = sadd.s32 1, %s18
    $region7: #{tpu_custom_call.1} parent=1 // loop_footer_branch
      %17 = sbr.rel target = $region3
    $region8: #{tpu_custom_call.1} parent=1 // loop_exit
      _
    %435 = vsyncpa [#allocation4], 1
    %s436 = scalar_lea.sflag [#allocation4], 1
    %437 = vsyncpa %s436, 1
    %438 = vsyncpa [#allocation7], 1
    %439 = vsyncpa [#allocation5], 1
    %s440 = scalar_lea.sflag [#allocation5], 1
    %441 = vsyncpa %s440, 1

</llo_original>
